<compile_context>
chip_gen: v7x
topology: tpu7x:2x2x1
jax: 0.10.0
libtpu: 0.0.40
codegen_flags: <defaults>
</compile_context>

<pallas_src>
import jax
import jax.numpy as jnp
from jax.experimental import pallas as pl
from jax.experimental.pallas import tpu as pltpu

_MIB = 1024 * 1024
_STATS_BLOCK_BYTES = 4 * _MIB   # f32-equivalent x-block budget for the stats pass
_APPLY_BLOCK_BYTES = 6 * _MIB   # f32-equivalent block budget for the apply pass
_VMEM_LIMIT_BYTES = 40 * _MIB   # explicit scoped-VMEM budget (safe on v5e/v6e/v7x)


def _round_down(n, m):
    return (n // m) * m


def _pick_tiles(n_rows, n_cols, budget_f32_bytes):
    """(TR, TC) block for an (n_rows, n_cols) array, sized by a byte budget.

    TR is a multiple of 8 (or the full row extent), TC a multiple of 128 (or
    the full column extent), with TR*TC*4 ~= budget_f32_bytes.
    """
    rows_aligned = (n_rows % 8 == 0)
    tr = min(n_rows, 64) if rows_aligned else n_rows
    cols_budget = max(128, _round_down(budget_f32_bytes // (tr * 4), 128))
    if cols_budget >= n_cols:
        tc = n_cols                                   # single full-width column block
        if rows_aligned:                              # spend leftover budget on rows
            tr = min(n_rows, max(8, _round_down(
                budget_f32_bytes // (max(n_cols, 128) * 4), 8)))
    else:
        tc = cols_budget
    return int(tr), int(tc)


# ---------------------------------------------------------------------------
# Pass 1: per-(b, c) min / max / shifted sum / shifted sum-of-squares.
# grid = (row_blocks, n_chunks, steps):
#   * row_blocks, n_chunks are "parallel" (megacore sharding),
#   * steps is the "arbitrary" reduction axis walked with VMEM scratch
#     accumulators; the packed (1, TR, 8) output block is written once per
#     (row_block, chunk).
# ---------------------------------------------------------------------------
def _stats_pass(x2d, BC, NPIX):
    TR, TC = _pick_tiles(BC, NPIX, _STATS_BLOCK_BYTES)
    row_blocks = pl.cdiv(BC, TR)
    col_blocks = pl.cdiv(NPIX, TC)
    needs_mask = (NPIX % TC) != 0

    # Expose >= 2 (ideally 8) parallel blocks even when B*C is tiny.
    n_chunks = 1
    if row_blocks < 8:
        for cand in (8, 4, 2):
            if col_blocks % cand == 0:
                n_chunks = cand
                break
    steps = col_blocks // n_chunks
    tail = NPIX - (col_blocks - 1) * TC    # valid columns of the ragged last block

    def stats_kernel(x_ref, stats_ref, mn_sc, mx_sc, sm_sc, sq_sc, sh_sc):
        c = pl.program_id(1)
        k = pl.program_id(2)
        x = x_ref[...].astype(jnp.float32)       # in-kernel dtype cast (free VPU work)

        @pl.when(k == 0)
        def _init():
            sh_sc[...] = x[:, 0:1]               # per-row shift for this chunk
            mn_sc[...] = jnp.full((TR, 1), jnp.inf, jnp.float32)
            mx_sc[...] = jnp.full((TR, 1), -jnp.inf, jnp.float32)
            sm_sc[...] = jnp.zeros((TR, 1), jnp.float32)
            sq_sc[...] = jnp.zeros((TR, 1), jnp.float32)

        shift = sh_sc[...]

        def accumulate(xb):
            xs = xb - shift
            mn_sc[...] = jnp.minimum(mn_sc[...], jnp.min(xb, axis=1, keepdims=True))
            mx_sc[...] = jnp.maximum(mx_sc[...], jnp.max(xb, axis=1, keepdims=True))
            sm_sc[...] = sm_sc[...] + jnp.sum(xs, axis=1, keepdims=True)
            sq_sc[...] = sq_sc[...] + jnp.sum(xs * xs, axis=1, keepdims=True)

        if not needs_mask:
            accumulate(x)
        else:
            is_last = jnp.logical_and(c == n_chunks - 1, k == steps - 1)

            @pl.when(jnp.logical_not(is_last))
            def _full_block():
                accumulate(x)

            @pl.when(is_last)
            def _ragged_block():
                # Only the globally-last column block is ragged; `tail` is a
                # trace-time constant so this is a cheap static slice.
                accumulate(x[:, :tail])

        @pl.when(k == steps - 1)
        def _flush():
            stats_ref[0] = jnp.concatenate(
                [mn_sc[...], mx_sc[...], sm_sc[...], sq_sc[...], sh_sc[...],
                 jnp.zeros((TR, 3), jnp.float32)], axis=1)

    stats = pl.pallas_call(
        stats_kernel,
        out_shape=jax.ShapeDtypeStruct((n_chunks, BC, 8), jnp.float32),
        grid=(row_blocks, n_chunks, steps),
        in_specs=[pl.BlockSpec((TR, TC), lambda i, c, k: (i, c * steps + k))],
        out_specs=pl.BlockSpec((1, TR, 8), lambda i, c, k: (c, i, 0)),
        scratch_shapes=[pltpu.VMEM((TR, 1), jnp.float32) for _ in range(5)],
        compiler_params=pltpu.CompilerParams(
            dimension_semantics=("parallel", "parallel", "arbitrary"),
            vmem_limit_bytes=_VMEM_LIMIT_BYTES),
    )(x2d)
    return stats, n_chunks, steps * TC


# ---------------------------------------------------------------------------
# Pass 2: fused affine apply  out = x * scale_row + offset_row  (lane-dense).
# ---------------------------------------------------------------------------
def _apply_pass(x2d, scale_b, offset_b, BC, NPIX):
    TR, TC = _pick_tiles(BC, NPIX, _APPLY_BLOCK_BYTES)
    grid = (pl.cdiv(BC, TR), pl.cdiv(NPIX, TC))

    def apply_kernel(x_ref, scale_ref, offset_ref, o_ref):
        a = scale_ref[:, 0:1]
        b = offset_ref[:, 0:1]
        o_ref[...] = x_ref[...].astype(jnp.float32) * a + b

    return pl.pallas_call(
        apply_kernel,
        out_shape=jax.ShapeDtypeStruct((BC, NPIX), jnp.float32),
        grid=grid,
        in_specs=[
            pl.BlockSpec((TR, TC), lambda i, j: (i, j)),
            pl.BlockSpec((TR, 128), lambda i, j: (i, 0)),
            pl.BlockSpec((TR, 128), lambda i, j: (i, 0)),
        ],
        out_specs=pl.BlockSpec((TR, TC), lambda i, j: (i, j)),
        compiler_params=pltpu.CompilerParams(
            dimension_semantics=("parallel", "parallel"),
            vmem_limit_bytes=_VMEM_LIMIT_BYTES),
    )(x2d, scale_b, offset_b)


@jax.jit
def rcs_normalize(x):
    B, C, H, W = x.shape
    BC, NPIX = B * C, H * W
    x2d = x.reshape(BC, NPIX)                      # native dtype; cast in-kernel

    # ---- pass 1: per-(b, c, chunk) partial statistics (one read of x) ------
    stats, n_chunks, chunk_cols = _stats_pass(x2d, BC, NPIX)

    # ---- tiny epilogue on (n_chunks, B, C)-sized arrays (plain jnp) --------
    st = stats.reshape(n_chunks, B, C, 8)
    pmin, pmax = st[..., 0], st[..., 1]
    psum, pssq, pshift = st[..., 2], st[..., 3], st[..., 4]

    counts = jnp.clip(NPIX - jnp.arange(n_chunks, dtype=jnp.int32) * chunk_cols,
                      1, chunk_cols).astype(jnp.float32)
    w = counts[:, None, None]                      # (n_chunks, 1, 1)

    mean_rc = pshift + psum / w                    # per-(chunk, b, c) mean of raw x
    m2_rc = jnp.maximum(pssq - psum * psum / w, 0.0)

    n_tot = jnp.float32(B * NPIX)
    cmin = pmin.min(axis=(0, 1))                   # (C,) channel extremes of raw x
    cmax = pmax.max(axis=(0, 1))
    mean_c = (w * mean_rc).sum(axis=(0, 1)) / n_tot
    m2_c = (m2_rc + w * (mean_rc - mean_c) ** 2).sum(axis=(0, 1))   # Chan combine
    var_c = m2_c / (n_tot - 1.0)                   # unbiased, like torch .std()

    mn, mx = cmin.min(), cmax.max()
    s1 = 1.0 / (mx - mn)                           # torch parity: no epsilon
    m1 = (mean_c - mn) * s1                        # per-channel mean of x1
    sd1 = jnp.sqrt(var_c) * s1                     # per-channel std  of x1

    # x2 is monotone in x within a channel -> global extremes from channel extremes.
    cmin2 = ((cmin - mn) * s1 - m1) / sd1
    cmax2 = ((cmax - mn) * s1 - m1) / sd1
    mn2, mx2 = cmin2.min(), cmax2.max()
    s2 = 1.0 / (mx2 - mn2)

    scale_c = s1 * s2 / sd1
    offset_c = -(mn * s1 + m1) * s2 / sd1 - mn2 * s2

    # Lane-dense per-row scale/offset (row bc = b*C + c).
    scale_b = jnp.tile(jnp.tile(scale_c, B)[:, None], (1, 128))
    offset_b = jnp.tile(jnp.tile(offset_c, B)[:, None], (1, 128))

    # ---- pass 2: fused affine apply (read x once, write out once) ----------
    out2d = _apply_pass(x2d, scale_b, offset_b, BC, NPIX)
    return out2d.reshape(B, C, H, W)


def rcs_normalize_forward(t):
    """Equivalent of RcsNormalize.forward: t[0] is the image (B,C,H,W), rest passthrough."""
    out = list(t)
    out[0] = rcs_normalize(out[0])
    return tuple(out)


# ---------------------------------------------------------------------------
# Pure-JAX reference (mirrors the PyTorch module) for correctness checking
# ---------------------------------------------------------------------------
def rcs_normalize_ref(x):
    x = x.astype(jnp.float32)
    x = (x - x.min()) / (x.max() - x.min())
    mean = x.mean(axis=(0, 2, 3))
    std = x.std(axis=(0, 2, 3), ddof=1)            # torch default: unbiased
    x = (x - mean[None, :, None, None]) / std[None, :, None, None]
    return (x - x.min()) / (x.max() - x.min())


def _check(x, tol=1e-4):
    got = jax.block_until_ready(rcs_normalize(x))
    ref = rcs_normalize_ref(x)
    assert got.shape == x.shape and got.dtype == jnp.float32
    assert bool(jnp.all(jnp.isfinite(got)))
    err = float(jnp.max(jnp.abs(got - ref)))
    assert err < tol, f"max abs error vs reference: {err}"
    assert bool(jnp.allclose(got.min(), 0.0, atol=1e-5))
    assert bool(jnp.allclose(got.max(), 1.0, atol=1e-5))


if __name__ == "__main__":
    key = jax.random.PRNGKey(0)
    k1, k2, k3 = jax.random.split(key, 3)

    # Small canonical shape; exercises the single-block fast path + tuple API.
    B, C, H, W = 2, 4, 16, 16
    x = jax.random.uniform(k1, (B, C, H, W), jnp.float32, minval=-3.0, maxval=5.0)
    y = jax.random.normal(k2, (B, 4), jnp.float32)           # passthrough element
    out = rcs_normalize_forward((x, y))
    out = jax.tree_util.tree_map(jax.block_until_ready, out)
    assert out[1] is y or bool(jnp.all(out[1] == y))
    _check(x)

    # Wider shape whose H*W does not divide the column tile: exercises the
    # chunked parallel stats axis + the ragged (statically sliced) last block.
    x2 = jax.random.uniform(k3, (2, 4, 250, 525), jnp.float32, minval=-3.0, maxval=5.0)
    _check(x2)

    print("KERNEL_OK")
</pallas_src>

<mosaic_0001>
module attributes {stable_mosaic.version = 11 : i64} {
  func.func @stats_kernel(%arg0: i32, %arg1: i32, %arg2: i32, %arg3: memref<8x256xf32, #tpu.memory_space<vmem>>, %arg4: memref<1x8x8xf32, #tpu.memory_space<vmem>>, %arg5: memref<8x1xf32, #tpu.memory_space<vmem>>, %arg6: memref<8x1xf32, #tpu.memory_space<vmem>>, %arg7: memref<8x1xf32, #tpu.memory_space<vmem>>, %arg8: memref<8x1xf32, #tpu.memory_space<vmem>>, %arg9: memref<8x1xf32, #tpu.memory_space<vmem>>) attributes {dimension_semantics = [#tpu.dimension_semantics<parallel>, #tpu.dimension_semantics<parallel>, #tpu.dimension_semantics<arbitrary>], iteration_bounds = array<i64: 1, 1, 1>, scalar_prefetch = 0 : i64, scratch_operands = 5 : i64, tpu.core_type = #tpu.core_type<tc>, window_params = [{transform_indices = @transform_0, window_bounds = array<i64: 8, 256>}, {transform_indices = @transform_1, window_bounds = array<i64: 1, 8, 8>}]} {
    %c0 = arith.constant 0 : index
    %c0_0 = arith.constant 0 : index
    %0 = vector.load %arg3[%c0, %c0_0] : memref<8x256xf32, #tpu.memory_space<vmem>>, vector<8x256xf32>
    %c0_i32 = arith.constant 0 : i32
    %1 = arith.cmpi eq, %arg2, %c0_i32 : i32
    %2 = arith.extui %1 : i1 to i32
    %c0_i32_1 = arith.constant 0 : i32
    %3 = arith.cmpi ne, %2, %c0_i32_1 : i32
    scf.if %3 {
      %31 = vector.extract_strided_slice %0 {offsets = [0, 0], sizes = [8, 1], strides = [1, 1]} : vector<8x256xf32> to vector<8x1xf32>
      %c0_25 = arith.constant 0 : index
      %c0_26 = arith.constant 0 : index
      %32 = vector.load %arg9[%c0_25, %c0_26] : memref<8x1xf32, #tpu.memory_space<vmem>>, vector<8x1xf32>
      tpu.vector_store %arg9[%c0_25, %c0_26], %31 {strides = array<i32>} : memref<8x1xf32, #tpu.memory_space<vmem>>, vector<8x1xf32>,
      %cst_27 = arith.constant 0x7F800000 : f32
      %33 = vector.broadcast %cst_27 : f32 to vector<8x1xf32>
      %c0_28 = arith.constant 0 : index
      %c0_29 = arith.constant 0 : index
      %34 = vector.load %arg5[%c0_28, %c0_29] : memref<8x1xf32, #tpu.memory_space<vmem>>, vector<8x1xf32>
      tpu.vector_store %arg5[%c0_28, %c0_29], %33 {strides = array<i32>} : memref<8x1xf32, #tpu.memory_space<vmem>>, vector<8x1xf32>,
      %cst_30 = arith.constant 0xFF800000 : f32
      %35 = vector.broadcast %cst_30 : f32 to vector<8x1xf32>
      %c0_31 = arith.constant 0 : index
      %c0_32 = arith.constant 0 : index
      %36 = vector.load %arg6[%c0_31, %c0_32] : memref<8x1xf32, #tpu.memory_space<vmem>>, vector<8x1xf32>
      tpu.vector_store %arg6[%c0_31, %c0_32], %35 {strides = array<i32>} : memref<8x1xf32, #tpu.memory_space<vmem>>, vector<8x1xf32>,
      %cst_33 = arith.constant 0.000000e+00 : f32
      %37 = vector.broadcast %cst_33 : f32 to vector<8x1xf32>
      %c0_34 = arith.constant 0 : index
      %c0_35 = arith.constant 0 : index
      %38 = vector.load %arg7[%c0_34, %c0_35] : memref<8x1xf32, #tpu.memory_space<vmem>>, vector<8x1xf32>
      tpu.vector_store %arg7[%c0_34, %c0_35], %37 {strides = array<i32>} : memref<8x1xf32, #tpu.memory_space<vmem>>, vector<8x1xf32>,
      %cst_36 = arith.constant 0.000000e+00 : f32
      %39 = vector.broadcast %cst_36 : f32 to vector<8x1xf32>
      %c0_37 = arith.constant 0 : index
      %c0_38 = arith.constant 0 : index
      %40 = vector.load %arg8[%c0_37, %c0_38] : memref<8x1xf32, #tpu.memory_space<vmem>>, vector<8x1xf32>
      tpu.vector_store %arg8[%c0_37, %c0_38], %39 {strides = array<i32>} : memref<8x1xf32, #tpu.memory_space<vmem>>, vector<8x1xf32>,
    } else {
    }
    %c0_2 = arith.constant 0 : index
    %c0_3 = arith.constant 0 : index
    %4 = vector.load %arg9[%c0_2, %c0_3] : memref<8x1xf32, #tpu.memory_space<vmem>>, vector<8x1xf32>
    %5 = vector.broadcast %4 : vector<8x1xf32> to vector<8x256xf32>
    %6 = arith.subf %0, %5 : vector<8x256xf32>
    %c0_4 = arith.constant 0 : index
    %c0_5 = arith.constant 0 : index
    %7 = vector.load %arg5[%c0_4, %c0_5] : memref<8x1xf32, #tpu.memory_space<vmem>>, vector<8x1xf32>
    %cst = arith.constant dense<0x7F800000> : vector<8xf32>
    %8 = vector.multi_reduction <minimumf>, %0, %cst [1] : vector<8x256xf32> to vector<8xf32>
    %9 = vector.shape_cast %8 : vector<8xf32> to vector<8x1xf32>
    %10 = arith.minimumf %7, %9 : vector<8x1xf32>
    %c0_6 = arith.constant 0 : index
    %c0_7 = arith.constant 0 : index
    %11 = vector.load %arg5[%c0_6, %c0_7] : memref<8x1xf32, #tpu.memory_space<vmem>>, vector<8x1xf32>
    tpu.vector_store %arg5[%c0_6, %c0_7], %10 {strides = array<i32>} : memref<8x1xf32, #tpu.memory_space<vmem>>, vector<8x1xf32>,
    %c0_8 = arith.constant 0 : index
    %c0_9 = arith.constant 0 : index
    %12 = vector.load %arg6[%c0_8, %c0_9] : memref<8x1xf32, #tpu.memory_space<vmem>>, vector<8x1xf32>
    %cst_10 = arith.constant dense<0xFF800000> : vector<8xf32>
    %13 = vector.multi_reduction <maximumf>, %0, %cst_10 [1] : vector<8x256xf32> to vector<8xf32>
    %14 = vector.shape_cast %13 : vector<8xf32> to vector<8x1xf32>
    %15 = arith.maximumf %12, %14 : vector<8x1xf32>
    %c0_11 = arith.constant 0 : index
    %c0_12 = arith.constant 0 : index
    %16 = vector.load %arg6[%c0_11, %c0_12] : memref<8x1xf32, #tpu.memory_space<vmem>>, vector<8x1xf32>
    tpu.vector_store %arg6[%c0_11, %c0_12], %15 {strides = array<i32>} : memref<8x1xf32, #tpu.memory_space<vmem>>, vector<8x1xf32>,
    %c0_13 = arith.constant 0 : index
    %c0_14 = arith.constant 0 : index
    %17 = vector.load %arg7[%c0_13, %c0_14] : memref<8x1xf32, #tpu.memory_space<vmem>>, vector<8x1xf32>
    %cst_15 = arith.constant dense<0.000000e+00> : vector<8xf32>
    %18 = vector.multi_reduction <add>, %6, %cst_15 [1] : vector<8x256xf32> to vector<8xf32>
    %19 = vector.shape_cast %18 : vector<8xf32> to vector<8x1xf32>
    %20 = arith.addf %17, %19 : vector<8x1xf32>
    %c0_16 = arith.constant 0 : index
    %c0_17 = arith.constant 0 : index
    %21 = vector.load %arg7[%c0_16, %c0_17] : memref<8x1xf32, #tpu.memory_space<vmem>>, vector<8x1xf32>
    tpu.vector_store %arg7[%c0_16, %c0_17], %20 {strides = array<i32>} : memref<8x1xf32, #tpu.memory_space<vmem>>, vector<8x1xf32>,
    %c0_18 = arith.constant 0 : index
    %c0_19 = arith.constant 0 : index
    %22 = vector.load %arg8[%c0_18, %c0_19] : memref<8x1xf32, #tpu.memory_space<vmem>>, vector<8x1xf32>
    %23 = arith.mulf %6, %6 : vector<8x256xf32>
    %cst_20 = arith.constant dense<0.000000e+00> : vector<8xf32>
    %24 = vector.multi_reduction <add>, %23, %cst_20 [1] : vector<8x256xf32> to vector<8xf32>
    %25 = vector.shape_cast %24 : vector<8xf32> to vector<8x1xf32>
    %26 = arith.addf %22, %25 : vector<8x1xf32>
    %c0_21 = arith.constant 0 : index
    %c0_22 = arith.constant 0 : index
    %27 = vector.load %arg8[%c0_21, %c0_22] : memref<8x1xf32, #tpu.memory_space<vmem>>, vector<8x1xf32>
    tpu.vector_store %arg8[%c0_21, %c0_22], %26 {strides = array<i32>} : memref<8x1xf32, #tpu.memory_space<vmem>>, vector<8x1xf32>,
    %c0_i32_23 = arith.constant 0 : i32
    %28 = arith.cmpi eq, %arg2, %c0_i32_23 : i32
    %29 = arith.extui %28 : i1 to i32
    %c0_i32_24 = arith.constant 0 : i32
    %30 = arith.cmpi ne, %29, %c0_i32_24 : i32
    scf.if %30 {
      %c0_25 = arith.constant 0 : index
      %c0_26 = arith.constant 0 : index
      %31 = vector.load %arg5[%c0_25, %c0_26] : memref<8x1xf32, #tpu.memory_space<vmem>>, vector<8x1xf32>
      %c0_27 = arith.constant 0 : index
      %c0_28 = arith.constant 0 : index
      %32 = vector.load %arg6[%c0_27, %c0_28] : memref<8x1xf32, #tpu.memory_space<vmem>>, vector<8x1xf32>
      %c0_29 = arith.constant 0 : index
      %c0_30 = arith.constant 0 : index
      %33 = vector.load %arg7[%c0_29, %c0_30] : memref<8x1xf32, #tpu.memory_space<vmem>>, vector<8x1xf32>
      %c0_31 = arith.constant 0 : index
      %c0_32 = arith.constant 0 : index
      %34 = vector.load %arg8[%c0_31, %c0_32] : memref<8x1xf32, #tpu.memory_space<vmem>>, vector<8x1xf32>
      %c0_33 = arith.constant 0 : index
      %c0_34 = arith.constant 0 : index
      %35 = vector.load %arg9[%c0_33, %c0_34] : memref<8x1xf32, #tpu.memory_space<vmem>>, vector<8x1xf32>
      %cst_35 = arith.constant 0.000000e+00 : f32
      %36 = vector.broadcast %cst_35 : f32 to vector<8x3xf32>
      %37 = tpu.concatenate %31, %32, %33, %34, %35, %36 in 1 : vector<8x1xf32>, vector<8x1xf32>, vector<8x1xf32>, vector<8x1xf32>, vector<8x1xf32>, vector<8x3xf32> -> vector<8x8xf32>
      %c0_36 = arith.constant 0 : index
      %c0_37 = arith.constant 0 : index
      %c0_38 = arith.constant 0 : index
      %38 = vector.load %arg4[%c0_36, %c0_37, %c0_38] : memref<1x8x8xf32, #tpu.memory_space<vmem>>, vector<1x8x8xf32>
      %39 = vector.shape_cast %38 : vector<1x8x8xf32> to vector<8x8xf32>
      %40 = vector.shape_cast %37 : vector<8x8xf32> to vector<1x8x8xf32>
      tpu.vector_store %arg4[%c0_36, %c0_37, %c0_38], %40 {strides = array<i32>} : memref<1x8x8xf32, #tpu.memory_space<vmem>>, vector<1x8x8xf32>,
    } else {
    }
    return
  }
  func.func @transform_0(%arg0: i32, %arg1: i32, %arg2: i32) -> (i32, i32) {
    %c1_i32 = arith.constant 1 : i32
    %0 = arith.muli %arg1, %c1_i32 : i32
    %1 = arith.addi %0, %arg2 : i32
    %c0_i32 = arith.constant 0 : i32
    return %arg0, %1 : i32, i32
  }
  func.func @transform_1(%arg0: i32, %arg1: i32, %arg2: i32) -> (i32, i32, i32) {
    %c0_i32 = arith.constant 0 : i32
    %c0_i32_0 = arith.constant 0 : i32
    return %arg1, %arg0, %c0_i32 : i32, i32, i32
  }
}

module attributes {stable_mosaic.version = 11 : i64} {
  func.func @apply_kernel(%arg0: i32, %arg1: i32, %arg2: memref<8x256xf32, #tpu.memory_space<vmem>>, %arg3: memref<8x128xf32, #tpu.memory_space<vmem>>, %arg4: memref<8x128xf32, #tpu.memory_space<vmem>>, %arg5: memref<8x256xf32, #tpu.memory_space<vmem>>) attributes {dimension_semantics = [#tpu.dimension_semantics<parallel>, #tpu.dimension_semantics<parallel>], iteration_bounds = array<i64: 1, 1>, scalar_prefetch = 0 : i64, scratch_operands = 0 : i64, tpu.core_type = #tpu.core_type<tc>, window_params = [{transform_indices = @transform_0, window_bounds = array<i64: 8, 256>}, {transform_indices = @transform_1, window_bounds = array<i64: 8, 128>}, {transform_indices = @transform_2, window_bounds = array<i64: 8, 128>}, {transform_indices = @transform_3, window_bounds = array<i64: 8, 256>}]} {
    %c0 = arith.constant 0 : index
    %c0_0 = arith.constant 0 : index
    %0 = vector.load %arg3[%c0, %c0_0] : memref<8x128xf32, #tpu.memory_space<vmem>>, vector<8x1xf32>
    %c0_1 = arith.constant 0 : index
    %c0_2 = arith.constant 0 : index
    %1 = vector.load %arg4[%c0_1, %c0_2] : memref<8x128xf32, #tpu.memory_space<vmem>>, vector<8x1xf32>
    %c0_3 = arith.constant 0 : index
    %c0_4 = arith.constant 0 : index
    %2 = vector.load %arg2[%c0_3, %c0_4] : memref<8x256xf32, #tpu.memory_space<vmem>>, vector<8x256xf32>
    %3 = vector.broadcast %0 : vector<8x1xf32> to vector<8x256xf32>
    %4 = arith.mulf %2, %3 : vector<8x256xf32>
    %5 = vector.broadcast %1 : vector<8x1xf32> to vector<8x256xf32>
    %6 = arith.addf %4, %5 : vector<8x256xf32>
    %c0_5 = arith.constant 0 : index
    %c0_6 = arith.constant 0 : index
    %7 = vector.load %arg5[%c0_5, %c0_6] : memref<8x256xf32, #tpu.memory_space<vmem>>, vector<8x256xf32>
    tpu.vector_store %arg5[%c0_5, %c0_6], %6 {strides = array<i32>} : memref<8x256xf32, #tpu.memory_space<vmem>>, vector<8x256xf32>,
    return
  }
  func.func @transform_0(%arg0: i32, %arg1: i32) -> (i32, i32) {
    %c0_i32 = arith.constant 0 : i32
    return %arg0, %arg1 : i32, i32
  }
  func.func @transform_1(%arg0: i32, %arg1: i32) -> (i32, i32) {
    %c0_i32 = arith.constant 0 : i32
    %c0_i32_0 = arith.constant 0 : i32
    return %arg0, %c0_i32 : i32, i32
  }
  func.func @transform_2(%arg0: i32, %arg1: i32) -> (i32, i32) {
    %c0_i32 = arith.constant 0 : i32
    %c0_i32_0 = arith.constant 0 : i32
    return %arg0, %c0_i32 : i32, i32
  }
  func.func @transform_3(%arg0: i32, %arg1: i32) -> (i32, i32) {
    %c0_i32 = arith.constant 0 : i32
    return %arg0, %arg1 : i32, i32
  }
}

</mosaic_0001>

<llo_original>
// kernel: tile.30
$region0: #{tile.30}
  #allocation0 [shape = 's32[1]{0}', space=sflag, size = 0x4, scoped, tag = 'scoped memory for tile.30']
  %s0 = inlined_call_operand.vmem [shape: f32[4], index: 0, kind: input, shape index: {}]
  %s1 = inlined_call_operand.vmem [shape: f32[2,4], index: 1, kind: output, shape index: {}]
  // Predicated region
  $region2: #{tile.30} parent=0 // pred_check
    _
  $region3: #{tile.30} parent=0 // pred_check_branch
    %3 = sbr.rel (0) target = $region5
  $region4: #{tile.30} parent=0 // pred_region
    _
  $region5: #{tile.30} parent=0 // pred_fallthru
    _
  %v4 = vld [vmem:[%s0] ss:$0 sm:$0xff]
  %5 = vst [vmem:[%s1] sm:$0x3] %v4

// kernel: rcs_normalize.3
$region0: #{rcs_normalize.3}
  #allocation0 [shape = 'u32[]', space=smem, size = 0x4, offset = 0x4, fixed_abs, tag = 'smem constant byte address 0x4 - core index']
  #allocation1 [shape = 'u32[144,128]{1,0:T(1,128)}', space=vmem, size = 0x12000, scoped, tag = 'internal scratch']
  %s0 = inlined_call_operand.vmem [shape: f32[8,256], index: 0, kind: input, shape index: {}]
  %s1 = inlined_call_operand.vmem [shape: f32[8,128], index: 1, kind: input, shape index: {}]
  %s2 = inlined_call_operand.vmem [shape: f32[8,128], index: 2, kind: input, shape index: {}]
  %s3 = inlined_call_operand.vmem [shape: f32[8,256], index: 3, kind: output, shape index: {}]
  %s4 = sld [smem:[#allocation0]]
  $region22: #{rcs_normalize.3} parent=0
    _
  %s6 = ssub.s32 1, %s4
  %s7 = scalar_select 0, %s6, %s4
  // Predicated region
  $region2: #{rcs_normalize.3} parent=0 // pred_check
    _
  $region3: #{rcs_normalize.3} parent=0 // pred_check_branch
    %9 = sbr.rel (0) target = $region5
  $region4: #{rcs_normalize.3} parent=0 // pred_region
    _
  $region5: #{rcs_normalize.3} parent=0 // pred_fallthru
    _
  // Predicated region
  $region6: #{rcs_normalize.3} parent=0 // pred_check
    _
  $region7: #{rcs_normalize.3} parent=0 // pred_check_branch
    %11 = sbr.rel (0) target = $region9
  $region8: #{rcs_normalize.3} parent=0 // pred_region
    _
  $region9: #{rcs_normalize.3} parent=0 // pred_fallthru
    _
  // Predicated region
  $region10: #{rcs_normalize.3} parent=0 // pred_check
    _
  $region11: #{rcs_normalize.3} parent=0 // pred_check_branch
    %13 = sbr.rel (0) target = $region13
  $region12: #{rcs_normalize.3} parent=0 // pred_region
    _
  $region13: #{rcs_normalize.3} parent=0 // pred_fallthru
    _
  %v14 = vld [vmem:[%s1] sm:$0xff]
  %v15 = vld [vmem:[%s2] sm:$0xff]
  %v16 = vld [vmem:[%s0] sm:$0xff]
  %v17 = vld [vmem:[%s0 + $0x8] sm:$0xff]
  %19 = vset.pattern.permute.xlu0 0
  %20 = vperm.xlu0 %19, %v14
  %v21 = vpop.permute.xlu0 %20
  %v23 = vmul.f32 %v16, %v21
  %v24 = vmul.f32 %v17, %v21
  %26 = vset.pattern.permute.xlu0 0
  %27 = vperm.xlu0 %26, %v15
  %v28 = vpop.permute.xlu0 %27
  %v30 = vadd.f32 %v23, %v28
  %v31 = vadd.f32 %v24, %v28
  %32 = vst [vmem:[%s3] sm:$0xff] %v30
  %33 = vst [vmem:[%s3 + $0x8] sm:$0xff] %v31
  // Predicated region
  $region14: #{rcs_normalize.3} parent=0 // pred_check
    _
  $region15: #{rcs_normalize.3} parent=0 // pred_check_branch
    %35 = sbr.rel (0) target = $region17
  $region16: #{rcs_normalize.3} parent=0 // pred_region
    _
  $region17: #{rcs_normalize.3} parent=0 // pred_fallthru
    _
  // Predicated region
  $region18: #{rcs_normalize.3} parent=0 // pred_check
    _
  $region19: #{rcs_normalize.3} parent=0 // pred_check_branch
    %37 = sbr.rel (0) target = $region21
  $region20: #{rcs_normalize.3} parent=0 // pred_region
    _
  $region21: #{rcs_normalize.3} parent=0 // pred_fallthru
    _

// kernel: rcs_normalize.2
$region0: #{rcs_normalize.2}
  #allocation0 [shape = 'u32[]', space=smem, size = 0x4, offset = 0x4, fixed_abs, tag = 'smem constant byte address 0x4 - core index']
  #allocation1 [shape = 'u32[144,128]{1,0:T(1,128)}', space=vmem, size = 0x12000, scoped, tag = 'internal scratch']
  #allocation2 [shape = 'f32[8,1]{1,0:T(8,128)}', space=vmem, size = 0x1000, scoped, tag = 'scratch operand']
  #allocation3 [shape = 'f32[8,1]{1,0:T(8,128)}', space=vmem, size = 0x1000, scoped, tag = 'scratch operand']
  #allocation4 [shape = 'f32[8,1]{1,0:T(8,128)}', space=vmem, size = 0x1000, scoped, tag = 'scratch operand']
  #allocation5 [shape = 'f32[8,1]{1,0:T(8,128)}', space=vmem, size = 0x1000, scoped, tag = 'scratch operand']
  #allocation6 [shape = 'f32[8,1]{1,0:T(8,128)}', space=vmem, size = 0x1000, scoped, tag = 'scratch operand']
  %s0 = inlined_call_operand.vmem [shape: f32[8,256], index: 0, kind: input, shape index: {}]
  %s1 = inlined_call_operand.vmem [shape: f32[1,8,8], index: 1, kind: output, shape index: {}]
  %s2 = sld [smem:[#allocation0]]
  $region22: #{rcs_normalize.2} parent=0
    _
  %s4 = ssub.s32 1, %s2
  %s5 = scalar_select 0, %s4, %s2
  // Predicated region
  $region2: #{rcs_normalize.2} parent=0 // pred_check
    _
  $region3: #{rcs_normalize.2} parent=0 // pred_check_branch
    %7 = sbr.rel (0) target = $region5
  $region4: #{rcs_normalize.2} parent=0 // pred_region
    %s8 = sadd.s32 0, 0
    %s9 = smul.u32 2, %s8
    %p10 = scmp.lt.s32.totalorder %s9, 1
    %s11 = scalar_select %p10, %s9, 1
    %s12 = smul.addr %s11, 8
    %s13 = scalar_lea.vmem %s0, %s12
    %s14 = sadd.s32 0, 0
    %s15 = smul.u32 2, %s14
  $region5: #{rcs_normalize.2} parent=0 // pred_fallthru
    _
  %s16 = sadd.s32 0, 0
  %s17 = smul.u32 2, %s16
  %p18 = scmp.lt.s32.totalorder %s17, 1
  %s19 = scalar_select %p18, %s17, 1
  %s20 = smul.addr %s19, 8
  %s21 = scalar_lea.vmem %s0, %s20
  %s22 = sadd.s32 0, 0
  %s23 = smul.u32 2, %s22
  %p24 = scmp.lt.s32.totalorder %s23, 1
  %s25 = scalar_select %p24, %s23, 1
  %s26 = smul.addr %s25, 8
  %s27 = scalar_lea.vmem %s0, %s26
  %s28 = sadd.s32 0, 0
  %s29 = smul.u32 2, %s28
  %v30 = vld [vmem:[%s27] sm:$0xff]
  %v31 = vld [vmem:[%s27 + $0x8] sm:$0xff]
  %p32 = scmp.eq.s32.totalorder 0, 0
  // Predicated region
  $region6: #{rcs_normalize.2} parent=0 // pred_check
    %p33 = pneg %p32
  $region7: #{rcs_normalize.2} parent=0 // pred_check_branch
    %35 = sbr.rel (%p33) target = $region9
  $region8: #{rcs_normalize.2} parent=0 // pred_region
    %vm36 = vcmask 7168
    %37 = vst.msk [vmem:[#allocation6] sm:$0xff] %vm36, %v30
    %38 = vst.msk [vmem:[#allocation2] sm:$0xff] %vm36, inf
    %39 = vst.msk [vmem:[#allocation3] sm:$0xff] %vm36, -inf
    %40 = vst.msk [vmem:[#allocation4] sm:$0xff] %vm36, 0.0
    %41 = vst.msk [vmem:[#allocation5] sm:$0xff] %vm36, 0.0
  $region9: #{rcs_normalize.2} parent=0 // pred_fallthru
    _
  %v42 = vld [vmem:[#allocation6] sm:$0xff]
  %44 = vset.pattern.permute.xlu0 0
  %45 = vperm.xlu0 %44, %v42
  %v46 = vpop.permute.xlu0 %45
  %v48 = vsub.f32 %v30, %v46
  %v49 = vsub.f32 %v31, %v46
  %v50 = vld [vmem:[#allocation2] sm:$0xff]
  %v51 = vmin.f32 %v30, %v31
  %52 = vmin.xlane.f32.xlu0 %v51
  %v53 = vpop.xlane.xlu0 %52
  %v54 = vmin.f32 %v50, %v53
  %vm55 = vcmask 7168
  %56 = vst.msk [vmem:[#allocation2] sm:$0xff] %vm55, %v54
  %v57 = vld [vmem:[#allocation3] sm:$0xff]
  %v58 = vmax.f32 %v30, %v31
  %59 = vmax.xlane.f32.xlu0 %v58
  %v60 = vpop.xlane.xlu0 %59
  %v61 = vmax.f32 %v57, %v60
  %62 = vst.msk [vmem:[#allocation3] sm:$0xff] %vm55, %v61
  %v63 = vld [vmem:[#allocation4] sm:$0xff]
  %v64 = vadd.f32 %v48, %v49
  %65 = vadd.xlane.f32.xlu0 %v64
  %v66 = vpop.xlane.xlu0 %65
  %v67 = vadd.f32 %v63, %v66
  %68 = vst.msk [vmem:[#allocation4] sm:$0xff] %vm55, %v67
  %v69 = vld [vmem:[#allocation5] sm:$0xff]
  %v70 = vmul.f32 %v48, %v48
  %v71 = vmul.f32 %v49, %v49
  %v72 = vadd.f32 %v70, %v71
  %73 = vadd.xlane.f32.xlu0 %v72
  %v74 = vpop.xlane.xlu0 %73
  %v75 = vadd.f32 %v69, %v74
  %76 = vst.msk [vmem:[#allocation5] sm:$0xff] %vm55, %v75
  // Predicated region
  $region10: #{rcs_normalize.2} parent=0 // pred_check
    %p77 = pneg %p32
  $region11: #{rcs_normalize.2} parent=0 // pred_check_branch
    %79 = sbr.rel (%p77) target = $region13
  $region12: #{rcs_normalize.2} parent=0 // pred_region
    %v80 = vld [vmem:[#allocation2] sm:$0xff]
    %v81 = vld [vmem:[#allocation3] sm:$0xff]
    %v82 = vld [vmem:[#allocation4] sm:$0xff]
    %v83 = vld [vmem:[#allocation5] sm:$0xff]
    %v84 = vld [vmem:[#allocation6] sm:$0xff]
    %86 = vrot.lane.b32.xlu0 %v81, 1
    %v87 = vpop.permute.xlu0 %86
    %90 = vrot.lane.b32.xlu0 %v82, 2
    %v91 = vpop.permute.xlu0 %90
    %94 = vrot.lane.b32.xlu0 %v83, 3
    %v95 = vpop.permute.xlu0 %94
    %98 = vrot.lane.b32.xlu0 %v84, 4
    %v99 = vpop.permute.xlu0 %98
    %v101 = vsel %vm55, %v80, %v87
    %vm102 = vcmask 15360
    %v103 = vsel %vm102, %v101, %v91
    %vm104 = vcmask 23552
    %v105 = vsel %vm104, %v103, %v95
    %vm106 = vcmask 31744
    %v107 = vsel %vm106, %v105, %v99
    %vm108 = vcmask 39936
    %v109 = vsel %vm108, %v107, 0.0
    %vm110 = vcmask 64512
    %111 = vst.msk [vmem:[%s1] sm:$0xff] %vm110, %v109
  $region13: #{rcs_normalize.2} parent=0 // pred_fallthru
    _
  // Predicated region
  $region14: #{rcs_normalize.2} parent=0 // pred_check
    _
  $region15: #{rcs_normalize.2} parent=0 // pred_check_branch
    %113 = sbr.rel (0) target = $region17
  $region16: #{rcs_normalize.2} parent=0 // pred_region
    _
  $region17: #{rcs_normalize.2} parent=0 // pred_fallthru
    _
  // Predicated region
  $region18: #{rcs_normalize.2} parent=0 // pred_check
    _
  $region19: #{rcs_normalize.2} parent=0 // pred_check_branch
    %115 = sbr.rel (0) target = $region21
  $region20: #{rcs_normalize.2} parent=0 // pred_region
    _
  $region21: #{rcs_normalize.2} parent=0 // pred_fallthru
    _

</llo_original>
